<compile_context>
chip_gen: v6e
topology: v6e:2x2x1
jax: 0.10.0
libtpu: 0.0.40
codegen_flags: <defaults>
</compile_context>

<pallas_src>
import jax
import jax.numpy as jnp
from jax.experimental import pallas as pl
from jax.experimental.pallas import tpu as pltpu


def _round_up(n, m):
    return ((n + m - 1) // m) * m


def mlp_kernel(x_ref, w1_ref, b1_ref, w2_ref, b2_ref, o_ref):
    # fc1: MXU matmul with f32 accumulation; bias + ReLU on the VPU.
    h = jnp.dot(x_ref[...], w1_ref[...], preferred_element_type=jnp.float32)
    h = jnp.maximum(h + b1_ref[...].astype(jnp.float32), 0.0)
    # fc2: cast h back to the weight dtype so bf16 weights keep both MXU
    # inputs narrow (f32 weights -> pure f32, bit-exact path).
    out = jnp.dot(h.astype(w2_ref.dtype), w2_ref[...],
                  preferred_element_type=jnp.float32)
    out = out + b2_ref[...].astype(jnp.float32)
    o_ref[...] = out.astype(o_ref.dtype)


def dnn_classifier_forward(x, w1, b1, w2, b2, *, tile_b=512, lane=128,
                           vmem_limit_bytes=64 * 1024 * 1024):
    """x: (B, input_dim); returns (B, output_dim)."""
    B, in_dim = x.shape
    hidden = w1.shape[1]
    out_dim = w2.shape[1]
    assert w1.shape[0] == in_dim and w2.shape[0] == hidden

    # --- lane padding: make hidden / out dims 128-multiples (zeros only). ---
    hid_p = _round_up(hidden, lane)
    out_p = _round_up(out_dim, lane)

    # --- batch tiling: weights resident, activations pipelined over tiles. ---
    tile_b = max(8, min(tile_b, _round_up(B, 8)))
    b_pad = _round_up(B, tile_b)

    xp = jnp.pad(x, ((0, b_pad - B), (0, 0)))
    w1p = jnp.pad(w1, ((0, 0), (0, hid_p - hidden)))
    b1p = jnp.pad(jnp.reshape(b1, (1, hidden)), ((0, 0), (0, hid_p - hidden)))
    w2p = jnp.pad(w2, ((0, hid_p - hidden), (0, out_p - out_dim)))
    b2p = jnp.pad(jnp.reshape(b2, (1, out_dim)), ((0, 0), (0, out_p - out_dim)))

    grid = (b_pad // tile_b,)

    out_padded = pl.pallas_call(
        mlp_kernel,
        out_shape=jax.ShapeDtypeStruct((b_pad, out_p), x.dtype),
        grid=grid,
        in_specs=[
            pl.BlockSpec((tile_b, in_dim), lambda i: (i, 0)),   # x: tiled over batch
            pl.BlockSpec((in_dim, hid_p), lambda i: (0, 0)),    # w1: resident
            pl.BlockSpec((1, hid_p), lambda i: (0, 0)),         # b1: resident
            pl.BlockSpec((hid_p, out_p), lambda i: (0, 0)),     # w2: resident
            pl.BlockSpec((1, out_p), lambda i: (0, 0)),         # b2: resident
        ],
        out_specs=pl.BlockSpec((tile_b, out_p), lambda i: (i, 0)),
        compiler_params=pltpu.CompilerParams(
            dimension_semantics=("parallel",),   # megacore sharding on v7x
            vmem_limit_bytes=vmem_limit_bytes,
        ),
    )(xp, w1p, b1p, w2p, b2p)

    # Slice away batch padding and the zero lanes beyond output_dim.
    return out_padded[:B, :out_dim]


def init_params(key, input_dim, hidden_dim, output_dim, dtype=jnp.float32):
    """Deterministic synthetic init (uniform, PyTorch-Linear-style fan_in bound)."""
    k1, k2, k3, k4 = jax.random.split(key, 4)
    bound1 = 1.0 / (input_dim ** 0.5)
    bound2 = 1.0 / (hidden_dim ** 0.5)
    w1 = jax.random.uniform(k1, (input_dim, hidden_dim), dtype, -bound1, bound1)
    b1 = jax.random.uniform(k2, (1, hidden_dim), dtype, -bound1, bound1)
    w2 = jax.random.uniform(k3, (hidden_dim, output_dim), dtype, -bound2, bound2)
    b2 = jax.random.uniform(k4, (1, output_dim), dtype, -bound2, bound2)
    return w1, b1, w2, b2


if __name__ == "__main__":
    # Small shapes consistent with the module: batch=8, input_dim=32, hidden=64, output=16
    batch, input_dim, hidden_dim, output_dim = 8, 32, 64, 16

    key = jax.random.PRNGKey(0)
    kx, kp = jax.random.split(key)
    x = jax.random.normal(kx, (batch, input_dim), jnp.float32)
    w1, b1, w2, b2 = init_params(kp, input_dim, hidden_dim, output_dim)

    out = dnn_classifier_forward(x, w1, b1, w2, b2)
    out = jax.block_until_ready(out)

    # reference check in plain JAX
    ref = jnp.maximum(x @ w1 + b1, 0.0) @ w2 + b2
    assert out.shape == (batch, output_dim)
    assert jnp.allclose(out, ref, atol=1e-5, rtol=1e-5)

    print("KERNEL_OK")
</pallas_src>

<mosaic_0001>
module attributes {stable_mosaic.version = 11 : i64} {
  func.func @mlp_kernel(%arg0: i32, %arg1: memref<8x32xf32, #tpu.memory_space<vmem>>, %arg2: memref<32x128xf32, #tpu.memory_space<vmem>>, %arg3: memref<1x128xf32, #tpu.memory_space<vmem>>, %arg4: memref<128x128xf32, #tpu.memory_space<vmem>>, %arg5: memref<1x128xf32, #tpu.memory_space<vmem>>, %arg6: memref<8x128xf32, #tpu.memory_space<vmem>>) attributes {dimension_semantics = [#tpu.dimension_semantics<parallel>], iteration_bounds = array<i64: 1>, scalar_prefetch = 0 : i64, scratch_operands = 0 : i64, tpu.core_type = #tpu.core_type<tc>, window_params = [{transform_indices = @transform_0, window_bounds = array<i64: 8, 32>}, {pipeline_mode = #tpu.pipeline_mode<synchronous>, transform_indices = @transform_1, window_bounds = array<i64: 32, 128>}, {pipeline_mode = #tpu.pipeline_mode<synchronous>, transform_indices = @transform_2, window_bounds = array<i64: 1, 128>}, {pipeline_mode = #tpu.pipeline_mode<synchronous>, transform_indices = @transform_3, window_bounds = array<i64: 128, 128>}, {pipeline_mode = #tpu.pipeline_mode<synchronous>, transform_indices = @transform_4, window_bounds = array<i64: 1, 128>}, {transform_indices = @transform_5, window_bounds = array<i64: 8, 128>}]} {
    %c0 = arith.constant 0 : index
    %c0_0 = arith.constant 0 : index
    %0 = vector.load %arg1[%c0, %c0_0] : memref<8x32xf32, #tpu.memory_space<vmem>>, vector<8x32xf32>
    %c0_1 = arith.constant 0 : index
    %c0_2 = arith.constant 0 : index
    %1 = vector.load %arg2[%c0_1, %c0_2] : memref<32x128xf32, #tpu.memory_space<vmem>>, vector<32x128xf32>
    %cst = arith.constant dense<0.000000e+00> : vector<8x128xf32>
    %2 = tpu.matmul %0, %1, %cst {dimension_numbers = #tpu.dot_dimension_numbers<[1], [0], [0], [1], [0, 0, 1, 1], [], []>} : vector<8x32xf32>, vector<32x128xf32>, vector<8x128xf32> -> vector<8x128xf32>
    %c0_3 = arith.constant 0 : index
    %c0_4 = arith.constant 0 : index
    %3 = vector.load %arg3[%c0_3, %c0_4] : memref<1x128xf32, #tpu.memory_space<vmem>>, vector<1x128xf32>
    %4 = vector.broadcast %3 : vector<1x128xf32> to vector<8x128xf32>
    %5 = arith.addf %2, %4 : vector<8x128xf32>
    %cst_5 = arith.constant 0.000000e+00 : f32
    %6 = vector.broadcast %cst_5 : f32 to vector<8x128xf32>
    %7 = arith.maximumf %5, %6 : vector<8x128xf32>
    %c0_6 = arith.constant 0 : index
    %c0_7 = arith.constant 0 : index
    %8 = vector.load %arg4[%c0_6, %c0_7] : memref<128x128xf32, #tpu.memory_space<vmem>>, vector<128x128xf32>
    %cst_8 = arith.constant dense<0.000000e+00> : vector<8x128xf32>
    %9 = tpu.matmul %7, %8, %cst_8 {dimension_numbers = #tpu.dot_dimension_numbers<[1], [0], [0], [1], [0, 0, 1, 1], [], []>} : vector<8x128xf32>, vector<128x128xf32>, vector<8x128xf32> -> vector<8x128xf32>
    %c0_9 = arith.constant 0 : index
    %c0_10 = arith.constant 0 : index
    %10 = vector.load %arg5[%c0_9, %c0_10] : memref<1x128xf32, #tpu.memory_space<vmem>>, vector<1x128xf32>
    %11 = vector.broadcast %10 : vector<1x128xf32> to vector<8x128xf32>
    %12 = arith.addf %9, %11 : vector<8x128xf32>
    %c0_11 = arith.constant 0 : index
    %c0_12 = arith.constant 0 : index
    %13 = vector.load %arg6[%c0_11, %c0_12] : memref<8x128xf32, #tpu.memory_space<vmem>>, vector<8x128xf32>
    tpu.vector_store %arg6[%c0_11, %c0_12], %12 {strides = array<i32>} : memref<8x128xf32, #tpu.memory_space<vmem>>, vector<8x128xf32>,
    return
  }
  func.func @transform_0(%arg0: i32) -> (i32, i32) {
    %c0_i32 = arith.constant 0 : i32
    %c0_i32_0 = arith.constant 0 : i32
    return %arg0, %c0_i32 : i32, i32
  }
  func.func @transform_1(%arg0: i32) -> (i32, i32) {
    %c0_i32 = arith.constant 0 : i32
    %c0_i32_0 = arith.constant 0 : i32
    %c0_i32_1 = arith.constant 0 : i32
    return %c0_i32, %c0_i32_0 : i32, i32
  }
  func.func @transform_2(%arg0: i32) -> (i32, i32) {
    %c0_i32 = arith.constant 0 : i32
    %c0_i32_0 = arith.constant 0 : i32
    %c0_i32_1 = arith.constant 0 : i32
    return %c0_i32, %c0_i32_0 : i32, i32
  }
  func.func @transform_3(%arg0: i32) -> (i32, i32) {
    %c0_i32 = arith.constant 0 : i32
    %c0_i32_0 = arith.constant 0 : i32
    %c0_i32_1 = arith.constant 0 : i32
    return %c0_i32, %c0_i32_0 : i32, i32
  }
  func.func @transform_4(%arg0: i32) -> (i32, i32) {
    %c0_i32 = arith.constant 0 : i32
    %c0_i32_0 = arith.constant 0 : i32
    %c0_i32_1 = arith.constant 0 : i32
    return %c0_i32, %c0_i32_0 : i32, i32
  }
  func.func @transform_5(%arg0: i32) -> (i32, i32) {
    %c0_i32 = arith.constant 0 : i32
    %c0_i32_0 = arith.constant 0 : i32
    return %arg0, %c0_i32 : i32, i32
  }
}

</mosaic_0001>

<llo_original>
// kernel: tpu_custom_call.1
$region0: #{tpu_custom_call.1}
  #allocation0 [shape = 'u32[]', space=smem, size = 0x4, offset = 0x4, fixed_abs, tag = 'smem constant byte address 0x4 - core index']
  #allocation1 [shape = 'u32[144,128]{1,0:T(1,128)}', space=vmem, size = 0x12000, scoped, tag = 'internal scratch']
  %s0 = inlined_call_operand.hbm [shape: f32[8,32], index: 0, kind: input, shape index: {}]
  %s1 = inlined_call_operand.hbm [shape: f32[32,128], index: 1, kind: input, shape index: {}]
  %s2 = inlined_call_operand.vmem [shape: f32[1,128], index: 2, kind: input, shape index: {}]
  %s3 = inlined_call_operand.hbm [shape: f32[128,128], index: 3, kind: input, shape index: {}]
  %s4 = inlined_call_operand.vmem [shape: f32[1,128], index: 4, kind: input, shape index: {}]
  %s5 = inlined_call_operand.hbm [shape: f32[8,128], index: 5, kind: output, shape index: {}]
  %s6 = sld [smem:[#allocation0]]
  $region42: #{tpu_custom_call.1} parent=0
    _
  %s8 = ssub.s32 1, %s6
  %s9 = scalar_select 0, %s8, %s6
  $region1: #{tpu_custom_call.1} parent=0
    #allocation2 [shape = 'u8[4096]{0}', space=vmem, size = 0x1000, scoped, tag = 'input window, operand 0, single buffered']
    #allocation3 [shape = 's32[1]{0}', space=sflag, size = 0x4, scoped, tag = 'scoped memory for tpu_custom_call.1']
    #allocation4 [shape = 's32[1]{0}', space=sflag, size = 0x4, scoped, tag = 'scoped memory for tpu_custom_call.1']
    #allocation5 [shape = 'u8[16384]{0}', space=vmem, size = 0x4000, scoped, tag = 'input window, operand 1, single buffered']
    #allocation6 [shape = 's32[1]{0}', space=sflag, size = 0x4, scoped, tag = 'scoped memory for tpu_custom_call.1']
    #allocation7 [shape = 'u8[65536]{0}', space=vmem, size = 0x10000, scoped, tag = 'input window, operand 3, single buffered']
    #allocation8 [shape = 'u8[4096]{0}', space=vmem, size = 0x1000, scoped, tag = 'output window, operand 0, single buffered']
    %10 = vsyncpa [#allocation3], 0
    %11 = vsyncpa [#allocation6], 0
    %12 = vsyncpa [#allocation4], 0
    // Predicated region
    $region2: #{tpu_custom_call.1} parent=1 // pred_check
      _
    $region3: #{tpu_custom_call.1} parent=1 // pred_check_branch
      %14 = sbr.rel (0) target = $region5
    $region4: #{tpu_custom_call.1} parent=1 // pred_region
      %s16 = ssub.s32 128, 128
      %17 = vsyncadd [#allocation3], %s16
      %s19 = sshll.u32 [#allocation2], 4
      %s20 = int_to_ptr.vmem [resolvable:$true] %s19
      %22 = dma.hbm_to_vmem [thread:$0]  %s0, 128, %s20, [#allocation3]
    $region5: #{tpu_custom_call.1} parent=1 // pred_fallthru
      _
    // Predicated region
    $region6: #{tpu_custom_call.1} parent=1 // pred_check
      _
    $region7: #{tpu_custom_call.1} parent=1 // pred_check_branch
      %24 = sbr.rel (0) target = $region9
    $region8: #{tpu_custom_call.1} parent=1 // pred_region
      %s26 = ssub.s32 512, 512
      %27 = vsyncadd [#allocation6], %s26
      %s28 = sshll.u32 [#allocation5], 4
      %s29 = int_to_ptr.vmem [resolvable:$true] %s28
      %34 = dma.hbm_to_vmem [thread:$0]  %s1, 512, %s29, [#allocation6], 128, 128, 8
    $region9: #{tpu_custom_call.1} parent=1 // pred_fallthru
      _
    // Predicated region
    $region10: #{tpu_custom_call.1} parent=1 // pred_check
      _
    $region11: #{tpu_custom_call.1} parent=1 // pred_check_branch
      %36 = sbr.rel (0) target = $region13
    $region12: #{tpu_custom_call.1} parent=1 // pred_region
      _
    $region13: #{tpu_custom_call.1} parent=1 // pred_fallthru
      _
    // Predicated region
    $region14: #{tpu_custom_call.1} parent=1 // pred_check
      _
    $region15: #{tpu_custom_call.1} parent=1 // pred_check_branch
      %38 = sbr.rel (0) target = $region17
    $region16: #{tpu_custom_call.1} parent=1 // pred_region
      %s40 = ssub.s32 2048, 2048
      %41 = vsyncadd [#allocation6], %s40
      %s42 = sshll.u32 [#allocation7], 4
      %s43 = int_to_ptr.vmem [resolvable:$true] %s42
      %48 = dma.hbm_to_vmem [thread:$0]  %s3, 2048, %s43, [#allocation6], 128, 128, 8
    $region17: #{tpu_custom_call.1} parent=1 // pred_fallthru
      _
    // Predicated region
    $region18: #{tpu_custom_call.1} parent=1 // pred_check
      _
    $region19: #{tpu_custom_call.1} parent=1 // pred_check_branch
      %50 = sbr.rel (0) target = $region21
    $region20: #{tpu_custom_call.1} parent=1 // pred_region
      _
    $region21: #{tpu_custom_call.1} parent=1 // pred_fallthru
      _
    // Predicated region
    $region22: #{tpu_custom_call.1} parent=1 // pred_check
      _
    $region23: #{tpu_custom_call.1} parent=1 // pred_check_branch
      %52 = sbr.rel (0) target = $region25
    $region24: #{tpu_custom_call.1} parent=1 // pred_region
      %53 = dma.done [#allocation3], 128
    $region25: #{tpu_custom_call.1} parent=1 // pred_fallthru
      _
    // Predicated region
    $region26: #{tpu_custom_call.1} parent=1 // pred_check
      _
    $region27: #{tpu_custom_call.1} parent=1 // pred_check_branch
      %55 = sbr.rel (0) target = $region29
    $region28: #{tpu_custom_call.1} parent=1 // pred_region
      %56 = dma.done [#allocation6], 512
    $region29: #{tpu_custom_call.1} parent=1 // pred_fallthru
      _
    // Predicated region
    $region30: #{tpu_custom_call.1} parent=1 // pred_check
      _
    $region31: #{tpu_custom_call.1} parent=1 // pred_check_branch
      %58 = sbr.rel (0) target = $region33
    $region32: #{tpu_custom_call.1} parent=1 // pred_region
      %59 = dma.done [#allocation6], 2048
    $region33: #{tpu_custom_call.1} parent=1 // pred_fallthru
      _
    %v60 = vld [vmem:[#allocation2] sm:$0xff]
    %v61 = vld [vmem:[#allocation5] sm:$0xff]
    %v62 = vld [vmem:[#allocation5 + $0x8] sm:$0xff]
    %v63 = vld [vmem:[#allocation5 + $0x10] sm:$0xff]
    %v64 = vld [vmem:[#allocation5 + $0x18] sm:$0xff]
    %v65 = vld [vmem:[%s2] sm:$0x1]
    %v67 = vlaneseq
    %v68 = vshrl.u32 %v67, 7
    %v69 = vsub.s32 0, %v68
    %v70 = vrot.slane %v65, %v69
    %vm72 = vcmask 261120
    %v74 = vsel %vm72, %v60, 0
    %76 = vmatprep.subr.mxu0 0.0
    %77 = vmatpush1.msra.mxu0 0.0
    %78 = vmatprep.subr.mxu0 0.0
    %79 = vmatpush1.msra.mxu0 0.0
    %80 = vmatprep.subr.mxu0 0.0
    %81 = vmatpush1.msra.mxu0 0.0
    %82 = vmatprep.subr.mxu0 0.0
    %83 = vmatpush1.msra.mxu0 0.0
    %84 = vmatprep.subr.mxu0 0.0
    %85 = vmatpush1.msra.mxu0 0.0
    %86 = vmatprep.subr.mxu0 0.0
    %87 = vmatpush1.msra.mxu0 0.0
    %88 = vmatprep.subr.mxu0 0.0
    %89 = vmatpush1.msra.mxu0 0.0
    %90 = vmatprep.subr.mxu0 0.0
    %91 = vmatpush1.msra.mxu0 0.0
    %92 = vmatprep.subr.mxu0 0.0
    %93 = vmatpush1.msra.mxu0 0.0
    %94 = vmatprep.subr.mxu0 0.0
    %95 = vmatpush1.msra.mxu0 0.0
    %96 = vmatprep.subr.mxu0 0.0
    %97 = vmatpush1.msra.mxu0 0.0
    %98 = vmatprep.subr.mxu0 0.0
    %99 = vmatpush1.msra.mxu0 0.0
    %100 = vmatprep.subr.mxu0 0.0
    %101 = vmatpush1.msra.mxu0 %v64
    %102 = vmatprep.subr.mxu0 0.0
    %103 = vmatpush1.msra.mxu0 %v63
    %104 = vmatprep.subr.mxu0 0.0
    %105 = vmatpush1.msra.mxu0 %v62
    %106 = vmatprep.subr.mxu0 0.0
    %107 = vmatpush1.msra.mxu0 %v61
    %108 = vmatprep.subr.mxu0 0.0
    %109 = vmatpush2.msra.mxu0 0.0
    %110 = vmatprep.subr.mxu0 0.0
    %111 = vmatpush2.msra.mxu0 0.0
    %112 = vmatprep.subr.mxu0 0.0
    %113 = vmatpush2.msra.mxu0 0.0
    %114 = vmatprep.subr.mxu0 0.0
    %115 = vmatpush2.msra.mxu0 0.0
    %116 = vmatprep.subr.mxu0 0.0
    %117 = vmatpush2.msra.mxu0 0.0
    %118 = vmatprep.subr.mxu0 0.0
    %119 = vmatpush2.msra.mxu0 0.0
    %120 = vmatprep.subr.mxu0 0.0
    %121 = vmatpush2.msra.mxu0 0.0
    %122 = vmatprep.subr.mxu0 0.0
    %123 = vmatpush2.msra.mxu0 0.0
    %124 = vmatprep.subr.mxu0 0.0
    %125 = vmatpush2.msra.mxu0 0.0
    %126 = vmatprep.subr.mxu0 0.0
    %127 = vmatpush2.msra.mxu0 0.0
    %128 = vmatprep.subr.mxu0 0.0
    %129 = vmatpush2.msra.mxu0 0.0
    %130 = vmatprep.subr.mxu0 0.0
    %131 = vmatpush2.msra.mxu0 0.0
    %132 = vmatprep.subr.mxu0 0.0
    %133 = vmatpush2.msra.mxu0 0.0
    %134 = vmatprep.subr.mxu0 0.0
    %135 = vmatpush2.msra.mxu0 0.0
    %136 = vmatprep.subr.mxu0 0.0
    %137 = vmatpush2.msra.mxu0 0.0
    %138 = vmatprep.subr.mxu0 0.0
    %139 = vmatpush2.msra.mxu0 0.0
    %140 = vmatprep.mubr.f32.mxu0 0.0
    %141 = vmatmul.mubr.f32.gmra.mxu0 %v74
    %v142 = vpop.f32.mrf.mxu0
    %v143 = vadd.f32 %v70, %v142
    %v144 = vpop.f32.mrf.mxu0
    %145 = vdwg.mxu0
    %v146 = vmax.f32 %v143, 0.0
    %v147 = vld [vmem:[#allocation7] sm:$0xff]
    %v148 = vld [vmem:[#allocation7 + $0x8] sm:$0xff]
    %v149 = vld [vmem:[#allocation7 + $0x10] sm:$0xff]
    %v150 = vld [vmem:[#allocation7 + $0x18] sm:$0xff]
    %v151 = vld [vmem:[#allocation7 + $0x20] sm:$0xff]
    %v152 = vld [vmem:[#allocation7 + $0x28] sm:$0xff]
    %v153 = vld [vmem:[#allocation7 + $0x30] sm:$0xff]
    %v154 = vld [vmem:[#allocation7 + $0x38] sm:$0xff]
    %v155 = vld [vmem:[#allocation7 + $0x40] sm:$0xff]
    %v156 = vld [vmem:[#allocation7 + $0x48] sm:$0xff]
    %v157 = vld [vmem:[#allocation7 + $0x50] sm:$0xff]
    %v158 = vld [vmem:[#allocation7 + $0x58] sm:$0xff]
    %v159 = vld [vmem:[#allocation7 + $0x60] sm:$0xff]
    %v160 = vld [vmem:[#allocation7 + $0x68] sm:$0xff]
    %v161 = vld [vmem:[#allocation7 + $0x70] sm:$0xff]
    %v162 = vld [vmem:[#allocation7 + $0x78] sm:$0xff]
    %v163 = vld [vmem:[%s4] sm:$0x1]
    %v165 = vlaneseq
    %v166 = vshrl.u32 %v165, 7
    %v167 = vsub.s32 0, %v166
    %v168 = vrot.slane %v163, %v167
    %170 = vmatprep.subr.mxu0 0.0
    %171 = vmatpush1.msra.mxu0 %v162
    %172 = vmatprep.subr.mxu0 0.0
    %173 = vmatpush1.msra.mxu0 %v161
    %174 = vmatprep.subr.mxu0 0.0
    %175 = vmatpush1.msra.mxu0 %v160
    %176 = vmatprep.subr.mxu0 0.0
    %177 = vmatpush1.msra.mxu0 %v159
    %178 = vmatprep.subr.mxu0 0.0
    %179 = vmatpush1.msra.mxu0 %v158
    %180 = vmatprep.subr.mxu0 0.0
    %181 = vmatpush1.msra.mxu0 %v157
    %182 = vmatprep.subr.mxu0 0.0
    %183 = vmatpush1.msra.mxu0 %v156
    %184 = vmatprep.subr.mxu0 0.0
    %185 = vmatpush1.msra.mxu0 %v155
    %186 = vmatprep.subr.mxu0 0.0
    %187 = vmatpush1.msra.mxu0 %v154
    %188 = vmatprep.subr.mxu0 0.0
    %189 = vmatpush1.msra.mxu0 %v153
    %190 = vmatprep.subr.mxu0 0.0
    %191 = vmatpush1.msra.mxu0 %v152
    %192 = vmatprep.subr.mxu0 0.0
    %193 = vmatpush1.msra.mxu0 %v151
    %194 = vmatprep.subr.mxu0 0.0
    %195 = vmatpush1.msra.mxu0 %v150
    %196 = vmatprep.subr.mxu0 0.0
    %197 = vmatpush1.msra.mxu0 %v149
    %198 = vmatprep.subr.mxu0 0.0
    %199 = vmatpush1.msra.mxu0 %v148
    %200 = vmatprep.subr.mxu0 0.0
    %201 = vmatpush1.msra.mxu0 %v147
    %202 = vmatprep.subr.mxu0 0.0
    %203 = vmatpush2.msra.mxu0 0.0
    %204 = vmatprep.subr.mxu0 0.0
    %205 = vmatpush2.msra.mxu0 0.0
    %206 = vmatprep.subr.mxu0 0.0
    %207 = vmatpush2.msra.mxu0 0.0
    %208 = vmatprep.subr.mxu0 0.0
    %209 = vmatpush2.msra.mxu0 0.0
    %210 = vmatprep.subr.mxu0 0.0
    %211 = vmatpush2.msra.mxu0 0.0
    %212 = vmatprep.subr.mxu0 0.0
    %213 = vmatpush2.msra.mxu0 0.0
    %214 = vmatprep.subr.mxu0 0.0
    %215 = vmatpush2.msra.mxu0 0.0
    %216 = vmatprep.subr.mxu0 0.0
    %217 = vmatpush2.msra.mxu0 0.0
    %218 = vmatprep.subr.mxu0 0.0
    %219 = vmatpush2.msra.mxu0 0.0
    %220 = vmatprep.subr.mxu0 0.0
    %221 = vmatpush2.msra.mxu0 0.0
    %222 = vmatprep.subr.mxu0 0.0
    %223 = vmatpush2.msra.mxu0 0.0
    %224 = vmatprep.subr.mxu0 0.0
    %225 = vmatpush2.msra.mxu0 0.0
    %226 = vmatprep.subr.mxu0 0.0
    %227 = vmatpush2.msra.mxu0 0.0
    %228 = vmatprep.subr.mxu0 0.0
    %229 = vmatpush2.msra.mxu0 0.0
    %230 = vmatprep.subr.mxu0 0.0
    %231 = vmatpush2.msra.mxu0 0.0
    %232 = vmatprep.subr.mxu0 0.0
    %233 = vmatpush2.msra.mxu0 0.0
    %234 = vmatprep.mubr.f32.mxu0 0.0
    %235 = vmatmul.mubr.f32.gmra.mxu0 %v146
    %v236 = vpop.f32.mrf.mxu0
    %v237 = vadd.f32 %v168, %v236
    %v238 = vpop.f32.mrf.mxu0
    %239 = vdwg.mxu0
    %240 = vst [vmem:[#allocation8] sm:$0xff] %v237
    // Predicated region
    $region34: #{tpu_custom_call.1} parent=1 // pred_check
      _
    $region35: #{tpu_custom_call.1} parent=1 // pred_check_branch
      %242 = sbr.rel (0) target = $region37
    $region36: #{tpu_custom_call.1} parent=1 // pred_region
      %s244 = ssub.s32 128, 128
      %245 = vsyncadd [#allocation4], %s244
      %s247 = sshll.u32 [#allocation8], 4
      %s248 = int_to_ptr.vmem [resolvable:$true] %s247
      %250 = dma.vmem_to_hbm [thread:$0]  %s248, 128, %s5, [#allocation4]
    $region37: #{tpu_custom_call.1} parent=1 // pred_fallthru
      _
    // Predicated region
    $region38: #{tpu_custom_call.1} parent=1 // pred_check
      _
    $region39: #{tpu_custom_call.1} parent=1 // pred_check_branch
      %252 = sbr.rel (0) target = $region41
    $region40: #{tpu_custom_call.1} parent=1 // pred_region
      %253 = dma.done [#allocation4], 128
    $region41: #{tpu_custom_call.1} parent=1 // pred_fallthru
      _
    %254 = vsyncpa [#allocation3], 1
    %255 = vsyncpa [#allocation6], 1
    %256 = vsyncpa [#allocation4], 1

</llo_original>
